<compile_context>
chip_gen: v7x
topology: tpu7x:2x2x1
jax: 0.10.0
libtpu: 0.0.40
codegen_flags: <defaults>
</compile_context>

<pallas_src>
import functools
import math

import jax
import jax.numpy as jnp
from jax.experimental import pallas as pl
from jax.experimental.pallas import tpu as pltpu

_LANES = 128
_SUBLANES = 8
_ROW_ALIGN = 32          # covers f32 (8), bf16/f16 (16), 8-bit (32) sublane packing
_PAD_LOGIT = -30000.0    # loss(-3e4, 0) == 0 exactly; representable in f16/bf16/f32


def _round_up(a: int, m: int) -> int:
    return ((a + m - 1) // m) * m


def _bce_with_logits_kernel(x_ref, t_ref, o_ref, acc_ref):
    """Processes one (tile_rows, 128) tile of the flattened logits/targets.

    grid = (num_shards, tiles_per_shard); axis 0 is 'parallel' (megacore),
    axis 1 is the 'arbitrary' streaming-reduction axis.  acc_ref is a single
    vreg-shaped (8, 128) f32 accumulator resident across the reduction axis.
    """
    i = pl.program_id(1)

    @pl.when(i == 0)
    def _():
        acc_ref[...] = jnp.zeros_like(acc_ref)

    x = x_ref[...].astype(jnp.float32)
    t = t_ref[...].astype(jnp.float32)

    # Numerically stable BCE-with-logits (same form PyTorch uses):
    #   max(x, 0) - x*t + log1p(exp(-|x|))
    loss = jnp.maximum(x, 0.0) - x * t + jnp.log1p(jnp.exp(-jnp.abs(x)))

    # Fold the (tile_rows, 128) tile into one (8, 128) vreg using pure VPU
    # adds (sum over the leading row-group axis only; no cross-lane XLU work).
    tile_rows = loss.shape[0]
    acc_ref[...] += loss.reshape(
        tile_rows // _SUBLANES, _SUBLANES, _LANES).sum(axis=0)

    @pl.when(i == pl.num_programs(1) - 1)
    def _():
        o_ref[...] = acc_ref[...]


def bce_with_logits_loss(x, target, *, max_tile_rows=4096, num_shards=2):
    """Mean BCE-with-logits over all elements (default nn.BCEWithLogitsLoss)."""
    assert x.shape == target.shape, "logits and targets must have the same shape"
    n_valid = math.prod(x.shape)
    assert n_valid > 0

    max_tile_rows = _round_up(max_tile_rows, _ROW_ALIGN)

    rows_needed = pl.cdiv(n_valid, _LANES)
    rows_per_shard = _round_up(pl.cdiv(rows_needed, num_shards), _ROW_ALIGN)
    tile_rows = min(max_tile_rows, rows_per_shard)
    tiles_per_shard = pl.cdiv(rows_per_shard, tile_rows)
    rows_per_shard = tiles_per_shard * tile_rows
    rows_padded = rows_per_shard * num_shards
    total_padded = rows_padded * _LANES

    x_flat = jnp.ravel(x)
    t_flat = jnp.ravel(target)
    pad = total_padded - n_valid
    if pad:
        # Pad with (logit = -3e4, target = 0): the stable loss there is
        # exactly 0, so padded elements contribute nothing to the sum.
        x_flat = jnp.concatenate(
            [x_flat, jnp.full((pad,), _PAD_LOGIT, dtype=x_flat.dtype)])
        t_flat = jnp.concatenate(
            [t_flat, jnp.zeros((pad,), dtype=t_flat.dtype)])

    x2 = x_flat.reshape(rows_padded, _LANES)
    t2 = t_flat.reshape(rows_padded, _LANES)

    in_map = lambda s, i: (s * tiles_per_shard + i, 0)

    partials = pl.pallas_call(
        _bce_with_logits_kernel,
        out_shape=jax.ShapeDtypeStruct(
            (num_shards * _SUBLANES, _LANES), jnp.float32),
        grid_spec=pltpu.PrefetchScalarGridSpec(
            num_scalar_prefetch=0,
            grid=(num_shards, tiles_per_shard),
            in_specs=[
                pl.BlockSpec((tile_rows, _LANES), in_map),
                pl.BlockSpec((tile_rows, _LANES), in_map),
            ],
            out_specs=pl.BlockSpec((_SUBLANES, _LANES), lambda s, i: (s, 0)),
            scratch_shapes=[pltpu.VMEM((_SUBLANES, _LANES), jnp.float32)],
        ),
        compiler_params=pltpu.CompilerParams(
            # axis 0: independent row shards (uses the 2nd TensorCore on v7x)
            # axis 1: streaming reduction over tiles
            dimension_semantics=("parallel", "arbitrary"),
        ),
    )(x2, t2)

    # Single tiny cross-lane reduce + mean, done once outside the kernel.
    return jnp.sum(partials) / n_valid


def _reference(x, target):
    x = x.astype(jnp.float32)
    t = target.astype(jnp.float32)
    loss = jnp.maximum(x, 0.0) - x * t + jnp.log1p(jnp.exp(-jnp.abs(x)))
    return jnp.mean(loss)


if __name__ == "__main__":
    key = jax.random.PRNGKey(0)
    k1, k2, k3, k4, k5, k6 = jax.random.split(key, 6)

    # Case 1: typical small classification logits [B, C], f32.
    x1 = jax.random.normal(k1, (16, 32), dtype=jnp.float32) * 2.0
    t1 = jax.random.uniform(k2, (16, 32), dtype=jnp.float32)
    out1 = jax.block_until_ready(bce_with_logits_loss(x1, t1))
    ref1 = _reference(x1, t1)
    assert jnp.allclose(out1, ref1, rtol=1e-5, atol=1e-6), (out1, ref1)

    # Case 2: ragged shape (odd B and C) exercises the zero-loss padding path.
    x2 = jax.random.normal(k3, (7, 13), dtype=jnp.float32) * 3.0
    t2 = jax.random.uniform(k4, (7, 13), dtype=jnp.float32)
    out2 = jax.block_until_ready(bce_with_logits_loss(x2, t2))
    ref2 = _reference(x2, t2)
    assert jnp.allclose(out2, ref2, rtol=1e-5, atol=1e-6), (out2, ref2)

    # Case 3: bf16 inputs (half HBM bytes, upcast in-kernel) with a small
    # max_tile_rows to force several reduction steps per shard.
    x3 = (jax.random.normal(k5, (64, 257), dtype=jnp.float32) * 2.0
          ).astype(jnp.bfloat16)
    t3 = jax.random.uniform(k6, (64, 257), dtype=jnp.float32
                            ).astype(jnp.bfloat16)
    out3 = jax.block_until_ready(
        bce_with_logits_loss(x3, t3, max_tile_rows=32))
    ref3 = _reference(x3, t3)
    assert jnp.allclose(out3, ref3, rtol=1e-4, atol=1e-5), (out3, ref3)

    print("KERNEL_OK")
</pallas_src>

<mosaic_0001>
module attributes {stable_mosaic.version = 11 : i64} {
  func.func @_bce_with_logits_kernel(%arg0: i32, %arg1: i32, %arg2: memref<32x128xf32, #tpu.memory_space<vmem>>, %arg3: memref<32x128xf32, #tpu.memory_space<vmem>>, %arg4: memref<8x128xf32, #tpu.memory_space<vmem>>, %arg5: memref<8x128xf32, #tpu.memory_space<vmem>>) attributes {dimension_semantics = [#tpu.dimension_semantics<parallel>, #tpu.dimension_semantics<arbitrary>], iteration_bounds = array<i64: 2, 1>, scalar_prefetch = 0 : i64, scratch_operands = 1 : i64, tpu.core_type = #tpu.core_type<tc>, window_params = [{transform_indices = @transform_0, window_bounds = array<i64: 32, 128>}, {transform_indices = @transform_1, window_bounds = array<i64: 32, 128>}, {transform_indices = @transform_2, window_bounds = array<i64: 8, 128>}]} {
    %c0_i32 = arith.constant 0 : i32
    %0 = arith.cmpi eq, %arg1, %c0_i32 : i32
    %1 = arith.extui %0 : i1 to i32
    %c0_i32_0 = arith.constant 0 : i32
    %2 = arith.cmpi ne, %1, %c0_i32_0 : i32
    scf.if %2 {
      %cst_12 = arith.constant 0.000000e+00 : f32
      %23 = vector.broadcast %cst_12 : f32 to vector<8x128xf32>
      %c0_13 = arith.constant 0 : index
      %c0_14 = arith.constant 0 : index
      %24 = vector.load %arg5[%c0_13, %c0_14] : memref<8x128xf32, #tpu.memory_space<vmem>>, vector<8x128xf32>
      tpu.vector_store %arg5[%c0_13, %c0_14], %23 {strides = array<i32>} : memref<8x128xf32, #tpu.memory_space<vmem>>, vector<8x128xf32>,
    } else {
    }
    %c0 = arith.constant 0 : index
    %c0_1 = arith.constant 0 : index
    %3 = vector.load %arg2[%c0, %c0_1] : memref<32x128xf32, #tpu.memory_space<vmem>>, vector<32x128xf32>
    %c0_2 = arith.constant 0 : index
    %c0_3 = arith.constant 0 : index
    %4 = vector.load %arg3[%c0_2, %c0_3] : memref<32x128xf32, #tpu.memory_space<vmem>>, vector<32x128xf32>
    %cst = arith.constant 0.000000e+00 : f32
    %5 = vector.broadcast %cst : f32 to vector<32x128xf32>
    %6 = arith.maximumf %3, %5 : vector<32x128xf32>
    %7 = arith.mulf %3, %4 : vector<32x128xf32>
    %8 = arith.subf %6, %7 : vector<32x128xf32>
    %9 = math.absf %3 : vector<32x128xf32>
    %cst_4 = arith.constant 0.000000e+00 : f32
    %10 = vector.broadcast %cst_4 : f32 to vector<32x128xf32>
    %11 = arith.subf %10, %9 : vector<32x128xf32>
    %12 = math.exp %11 : vector<32x128xf32>
    %13 = math.log1p %12 : vector<32x128xf32>
    %14 = arith.addf %8, %13 : vector<32x128xf32>
    %c0_5 = arith.constant 0 : index
    %c0_6 = arith.constant 0 : index
    %15 = vector.load %arg5[%c0_5, %c0_6] : memref<8x128xf32, #tpu.memory_space<vmem>>, vector<8x128xf32>
    %16 = vector.shape_cast %14 : vector<32x128xf32> to vector<4x8x128xf32>
    %cst_7 = arith.constant dense<0.000000e+00> : vector<8x128xf32>
    %17 = vector.multi_reduction <add>, %16, %cst_7 [0] : vector<4x8x128xf32> to vector<8x128xf32>
    %18 = arith.addf %15, %17 : vector<8x128xf32>
    %c0_8 = arith.constant 0 : index
    %c0_9 = arith.constant 0 : index
    %19 = vector.load %arg5[%c0_8, %c0_9] : memref<8x128xf32, #tpu.memory_space<vmem>>, vector<8x128xf32>
    tpu.vector_store %arg5[%c0_8, %c0_9], %18 {strides = array<i32>} : memref<8x128xf32, #tpu.memory_space<vmem>>, vector<8x128xf32>,
    %c0_i32_10 = arith.constant 0 : i32
    %20 = arith.cmpi eq, %arg1, %c0_i32_10 : i32
    %21 = arith.extui %20 : i1 to i32
    %c0_i32_11 = arith.constant 0 : i32
    %22 = arith.cmpi ne, %21, %c0_i32_11 : i32
    scf.if %22 {
      %c0_12 = arith.constant 0 : index
      %c0_13 = arith.constant 0 : index
      %23 = vector.load %arg5[%c0_12, %c0_13] : memref<8x128xf32, #tpu.memory_space<vmem>>, vector<8x128xf32>
      %c0_14 = arith.constant 0 : index
      %c0_15 = arith.constant 0 : index
      %24 = vector.load %arg4[%c0_14, %c0_15] : memref<8x128xf32, #tpu.memory_space<vmem>>, vector<8x128xf32>
      tpu.vector_store %arg4[%c0_14, %c0_15], %23 {strides = array<i32>} : memref<8x128xf32, #tpu.memory_space<vmem>>, vector<8x128xf32>,
    } else {
    }
    return
  }
  func.func @transform_0(%arg0: i32, %arg1: i32) -> (i32, i32) {
    %c1_i32 = arith.constant 1 : i32
    %0 = arith.muli %arg0, %c1_i32 : i32
    %1 = arith.addi %0, %arg1 : i32
    %c0_i32 = arith.constant 0 : i32
    %c0_i32_0 = arith.constant 0 : i32
    return %1, %c0_i32 : i32, i32
  }
  func.func @transform_1(%arg0: i32, %arg1: i32) -> (i32, i32) {
    %c1_i32 = arith.constant 1 : i32
    %0 = arith.muli %arg0, %c1_i32 : i32
    %1 = arith.addi %0, %arg1 : i32
    %c0_i32 = arith.constant 0 : i32
    %c0_i32_0 = arith.constant 0 : i32
    return %1, %c0_i32 : i32, i32
  }
  func.func @transform_2(%arg0: i32, %arg1: i32) -> (i32, i32) {
    %c0_i32 = arith.constant 0 : i32
    %c0_i32_0 = arith.constant 0 : i32
    return %arg0, %c0_i32 : i32, i32
  }
}

</mosaic_0001>

<llo_original>
// kernel: tpu_custom_call.1
$region0: #{tpu_custom_call.1}
  #allocation0 [shape = 'u32[]', space=smem, size = 0x4, offset = 0x4, fixed_abs, tag = 'smem constant byte address 0x4 - core index']
  #allocation1 [shape = 'u32[144,128]{1,0:T(1,128)}', space=vmem, size = 0x12000, scoped, tag = 'internal scratch']
  #allocation2 [shape = 'f32[8,128]{1,0:T(8,128)}', space=vmem, size = 0x1000, scoped, tag = 'scratch operand']
  %s0 = inlined_call_operand.hbm [shape: f32[64,128], index: 0, kind: input, shape index: {}]
  %s1 = inlined_call_operand.hbm [shape: f32[64,128], index: 1, kind: input, shape index: {}]
  %s2 = inlined_call_operand.hbm [shape: f32[16,128], index: 2, kind: output, shape index: {}]
  %s3 = sld [smem:[#allocation0]]
  $region57: #{tpu_custom_call.1} parent=0
    _
  %s5 = ssub.s32 1, %s3
  %s6 = scalar_select 0, %s5, %s3
  $region1: #{tpu_custom_call.1} parent=0
    #allocation3 [shape = 'u8[32768]{0}', space=vmem, size = 0x8000, scoped, tag = 'input window, operand 0']
    #allocation4 [shape = 's32[2]{0}', space=sflag, size = 0x8, scoped, tag = 'scoped memory for tpu_custom_call.1']
    #allocation5 [shape = 's32[2]{0}', space=sflag, size = 0x8, scoped, tag = 'scoped memory for tpu_custom_call.1']
    #allocation6 [shape = 'u8[32768]{0}', space=vmem, size = 0x8000, scoped, tag = 'input window, operand 1']
    #allocation7 [shape = 's32[2]{0}', space=sflag, size = 0x8, scoped, tag = 'scoped memory for tpu_custom_call.1']
    #allocation8 [shape = 'u8[8192]{0}', space=vmem, size = 0x2000, scoped, tag = 'output window, operand 0']
    %7 = vsyncpa [#allocation4], 0
    %s8 = scalar_lea.sflag [#allocation4], 1
    %9 = vsyncpa %s8, 0
    %10 = vsyncpa [#allocation7], 0
    %s11 = scalar_lea.sflag [#allocation7], 1
    %12 = vsyncpa %s11, 0
    %13 = vsyncpa [#allocation5], 0
    %s14 = scalar_lea.sflag [#allocation5], 1
    %15 = vsyncpa %s14, 0
    loop: start=0, step=1, limit=4
    $region2: #{tpu_custom_call.1} parent=1 // loop_pre_header
      _
    $region3: #{tpu_custom_call.1} parent=1 // loop_header
      %s17 = sphi 0, %s21
      %p18 = scmp.ge.s32.totalorder %s17, 4
      %s24 = sphi 0, %s36
      %s25 = sphi 0, %s32
      %s26 = sphi 0, %s24
      %s27 = sphi 0, %s25
      %s28 = sphi 0, %s26
      %s29 = sphi 0, %s27
      %s41 = sphi 0, %s43
      %s44 = sphi 0, %s41
      %s45 = sphi 0, %s44
      %s61 = sphi 0, %s45
      %s69 = sphi 0, %s71
      %s72 = sphi 0, %s69
      %s73 = sphi 0, %s72
      %s89 = sphi 0, %s73
      %s95 = sphi 0, %s97
      %s98 = sphi 0, %s95
      %s99 = sphi 0, %s98
      %s115 = sphi 0, %s99
    $region4: #{tpu_custom_call.1} parent=1 // loop_header_branch
      %20 = sbr.rel (%p18) target = $region8
    $region5: #{tpu_custom_call.1} parent=1 // loop_body
      %s22 = ssub.s32 %s17, 1
      %s23 = ssub.s32 %s17, 2
      %s30 = sadd.s32 1, %s25
      %p31 = scmp.ge.s32.totalorder %s30, 1
      %s32 = scalar_select %p31, 0, %s30
      %s33 = sadd.s32 1, %s24
      %s34 = scalar_select %p31, %s33, %s24
      %p35 = scmp.ge.s32.totalorder %s34, 2
      %s36 = scalar_select %p35, 0, %s34
      %s37 = sadd.s32 %s24, %s25
      %s38 = sadd.s32 %s36, %s32
      %s39 = ssub.s32 %s37, %s38
      %p40 = scmp.eq.s32.totalorder %s39, 0
      %s42 = sadd.s32 %s41, 1
      %s43 = scalar_select %p40, %s41, %s42
      %p46 = pneg %p40
      %p47 = scmp.eq.s32.totalorder %s17, 1
      %p48 = por %p46, %p47
      %p49 = scmp.ne.s32.totalorder %s41, %s44
      %p50 = scmp.eq.s32.totalorder %s17, 0
      %p51 = por %p49, %p50
      %p52 = scmp.ne.s32.totalorder %s41, %s44
      %p53 = scmp.eq.s32.totalorder %s22, 1
      %p54 = por %p52, %p53
      %p55 = scmp.ne.s32.totalorder %s44, %s45
      %p56 = scmp.eq.s32.totalorder %s22, 0
      %p57 = por %p55, %p56
      %p58 = scmp.ne.s32.totalorder %s44, %s45
      %p59 = scmp.eq.s32.totalorder %s23, 1
      %p60 = por %p58, %p59
      %p62 = scmp.ne.s32.totalorder %s45, %s61
      %p63 = scmp.eq.s32.totalorder %s23, 0
      %p64 = por %p62, %p63
      %s65 = sadd.s32 %s24, %s25
      %s66 = sadd.s32 %s36, %s32
      %s67 = ssub.s32 %s65, %s66
      %p68 = scmp.eq.s32.totalorder %s67, 0
      %s70 = sadd.s32 %s69, 1
      %s71 = scalar_select %p68, %s69, %s70
      %p74 = pneg %p68
      %p75 = scmp.eq.s32.totalorder %s17, 1
      %p76 = por %p74, %p75
      %p77 = scmp.ne.s32.totalorder %s69, %s72
      %p78 = scmp.eq.s32.totalorder %s17, 0
      %p79 = por %p77, %p78
      %p80 = scmp.ne.s32.totalorder %s69, %s72
      %p81 = scmp.eq.s32.totalorder %s22, 1
      %p82 = por %p80, %p81
      %p83 = scmp.ne.s32.totalorder %s72, %s73
      %p84 = scmp.eq.s32.totalorder %s22, 0
      %p85 = por %p83, %p84
      %p86 = scmp.ne.s32.totalorder %s72, %s73
      %p87 = scmp.eq.s32.totalorder %s23, 1
      %p88 = por %p86, %p87
      %p90 = scmp.ne.s32.totalorder %s73, %s89
      %p91 = scmp.eq.s32.totalorder %s23, 0
      %p92 = por %p90, %p91
      %s93 = ssub.s32 %s24, %s36
      %p94 = scmp.eq.s32.totalorder %s93, 0
      %s96 = sadd.s32 %s95, 1
      %s97 = scalar_select %p94, %s95, %s96
      %p100 = pneg %p94
      %p101 = scmp.eq.s32.totalorder %s17, 1
      %p102 = por %p100, %p101
      %p103 = scmp.ne.s32.totalorder %s95, %s98
      %p104 = scmp.eq.s32.totalorder %s17, 0
      %p105 = por %p103, %p104
      %p106 = scmp.ne.s32.totalorder %s95, %s98
      %p107 = scmp.eq.s32.totalorder %s22, 1
      %p108 = por %p106, %p107
      %p109 = scmp.ne.s32.totalorder %s98, %s99
      %p110 = scmp.eq.s32.totalorder %s22, 0
      %p111 = por %p109, %p110
      %p112 = scmp.ne.s32.totalorder %s98, %s99
      %p113 = scmp.eq.s32.totalorder %s23, 1
      %p114 = por %p112, %p113
      %p116 = scmp.ne.s32.totalorder %s99, %s115
      %p117 = scmp.eq.s32.totalorder %s23, 0
      %p118 = por %p116, %p117
      %p119 = scmp.le.s32.totalorder 1, %s17
      %p120 = scmp.lt.s32.totalorder %s17, 3
      %p121 = pnand %p119, %p120
      %p122 = pneg %p121
      // Predicated region
      $region9: #{tpu_custom_call.1} parent=5 // pred_check
        _
      $region10: #{tpu_custom_call.1} parent=5 // pred_check_branch
        %124 = sbr.rel (%p121) target = $region12
      $region11: #{tpu_custom_call.1} parent=5 // pred_region
        %s125 = ssub.s32 %s17, 1
      $region12: #{tpu_custom_call.1} parent=5 // pred_fallthru
        _
      %p126 = scmp.lt.s32.totalorder %s17, 2
      // Predicated region
      $region13: #{tpu_custom_call.1} parent=5 // pred_check
        %p127 = pneg %p126
      $region14: #{tpu_custom_call.1} parent=5 // pred_check_branch
        %129 = sbr.rel (%p127) target = $region16
      $region15: #{tpu_custom_call.1} parent=5 // pred_region
        // Predicated region
        $region17: #{tpu_custom_call.1} parent=15 // pred_check
          %p130 = pneg %p51
        $region18: #{tpu_custom_call.1} parent=15 // pred_check_branch
          %132 = sbr.rel (%p130) target = $region20
        $region19: #{tpu_custom_call.1} parent=15 // pred_region
          %s133 = sand.u32 %s41, 1
          %s134 = scalar_lea.sflag [#allocation4], %s133
          %s135 = sand.u32 %s41, 1
          %s136 = smul.addr %s135, 32
          %s137 = scalar_lea.vmem [#allocation3], %s136
          %s138 = sadd.s32 %s24, %s25
          %s139 = smul.u32 4, %s138
          %s141 = ssub.s32 512, 512
          %142 = vsyncadd %s134, %s141
          %s143 = smul.addr %s139, 128
          %s144 = scalar_lea.hbm %s0, %s143
          %s145 = sshll.u32 %s137, 4
          %s146 = int_to_ptr.vmem [resolvable:$true] %s145
          %151 = dma.hbm_to_vmem [thread:$0]  %s144, 512, %s146, %s134, 128, 128, 8
        $region20: #{tpu_custom_call.1} parent=15 // pred_fallthru
          _
        // Predicated region
        $region21: #{tpu_custom_call.1} parent=15 // pred_check
          %p152 = pneg %p79
        $region22: #{tpu_custom_call.1} parent=15 // pred_check_branch
          %154 = sbr.rel (%p152) target = $region24
        $region23: #{tpu_custom_call.1} parent=15 // pred_region
          %s155 = sand.u32 %s69, 1
          %s156 = scalar_lea.sflag [#allocation7], %s155
          %s157 = sand.u32 %s69, 1
          %s158 = smul.addr %s157, 32
          %s159 = scalar_lea.vmem [#allocation6], %s158
          %s160 = sadd.s32 %s24, %s25
          %s161 = smul.u32 4, %s160
          %s163 = ssub.s32 512, 512
          %164 = vsyncadd %s156, %s163
          %s165 = smul.addr %s161, 128
          %s166 = scalar_lea.hbm %s1, %s165
          %s167 = sshll.u32 %s159, 4
          %s168 = int_to_ptr.vmem [resolvable:$true] %s167
          %173 = dma.hbm_to_vmem [thread:$0]  %s166, 512, %s168, %s156, 128, 128, 8
        $region24: #{tpu_custom_call.1} parent=15 // pred_fallthru
          _
      $region16: #{tpu_custom_call.1} parent=5 // pred_fallthru
        _
      %p174 = scmp.le.s32.totalorder 1, %s17
      %p175 = scmp.lt.s32.totalorder %s17, 3
      %p176 = pnand %p174, %p175
      %p177 = pneg %p176
      // Predicated region
      $region25: #{tpu_custom_call.1} parent=5 // pred_check
        _
      $region26: #{tpu_custom_call.1} parent=5 // pred_check_branch
        %179 = sbr.rel (%p176) target = $region28
      $region27: #{tpu_custom_call.1} parent=5 // pred_region
        %s180 = ssub.s32 %s17, 1
        %s181 = sand.u32 %s44, 1
        %s182 = scalar_lea.sflag [#allocation4], %s181
        %s183 = sand.u32 %s44, 1
        %s184 = smul.addr %s183, 32
        %s185 = scalar_lea.vmem [#allocation3], %s184
        // Predicated region
        $region29: #{tpu_custom_call.1} parent=27 // pred_check
          %p186 = pneg %p57
        $region30: #{tpu_custom_call.1} parent=27 // pred_check_branch
          %188 = sbr.rel (%p186) target = $region32
        $region31: #{tpu_custom_call.1} parent=27 // pred_region
          %189 = dma.done %s182, 512
        $region32: #{tpu_custom_call.1} parent=27 // pred_fallthru
          _
        %s190 = sand.u32 %s72, 1
        %s191 = scalar_lea.sflag [#allocation7], %s190
        %s192 = sand.u32 %s72, 1
        %s193 = smul.addr %s192, 32
        %s194 = scalar_lea.vmem [#allocation6], %s193
        // Predicated region
        $region33: #{tpu_custom_call.1} parent=27 // pred_check
          %p195 = pneg %p85
        $region34: #{tpu_custom_call.1} parent=27 // pred_check_branch
          %197 = sbr.rel (%p195) target = $region36
        $region35: #{tpu_custom_call.1} parent=27 // pred_region
          %198 = dma.done %s191, 512
        $region36: #{tpu_custom_call.1} parent=27 // pred_fallthru
          _
        %s199 = sand.u32 %s44, 1
        %s200 = scalar_lea.sflag [#allocation4], %s199
        %s201 = sand.u32 %s44, 1
        %s202 = smul.addr %s201, 32
        %s203 = scalar_lea.vmem [#allocation3], %s202
        %p204 = pneg %p57
        %p205 = pneg %p54
        %s206 = sand.u32 %s72, 1
        %s207 = scalar_lea.sflag [#allocation7], %s206
        %s208 = sand.u32 %s72, 1
        %s209 = smul.addr %s208, 32
        %s210 = scalar_lea.vmem [#allocation6], %s209
        %p211 = pneg %p85
        %p212 = pneg %p82
        %p213 = pneg %p111
        %p214 = pneg %p108
        %s215 = sand.u32 %s98, 1
        %s216 = scalar_lea.sflag [#allocation5], %s215
        %s217 = sand.u32 %s98, 1
        %s218 = smul.addr %s217, 8
        %s219 = scalar_lea.vmem [#allocation8], %s218
        %s220 = sadd.s32 %s26, %s27
        %s221 = smul.u32 4, %s220
        %s222 = sadd.s32 %s26, %s27
        %s223 = smul.u32 4, %s222
        %p224 = scmp.eq.s32.totalorder %s27, 0
        // Predicated region
        $region37: #{tpu_custom_call.1} parent=27 // pred_check
          %p225 = pneg %p224
        $region38: #{tpu_custom_call.1} parent=27 // pred_check_branch
          %227 = sbr.rel (%p225) target = $region40
        $region39: #{tpu_custom_call.1} parent=27 // pred_region
          %228 = vst [vmem:[#allocation2] sm:$0xff] 0.0
        $region40: #{tpu_custom_call.1} parent=27 // pred_fallthru
          _
        %v229 = vld [vmem:[%s185] sm:$0xff]
        %v230 = vld [vmem:[%s185 + $0x8] sm:$0xff]
        %v231 = vld [vmem:[%s185 + $0x10] sm:$0xff]
        %v232 = vld [vmem:[%s185 + $0x18] sm:$0xff]
        %v233 = vld [vmem:[%s194] sm:$0xff]
        %v234 = vld [vmem:[%s194 + $0x8] sm:$0xff]
        %v235 = vld [vmem:[%s194 + $0x10] sm:$0xff]
        %v236 = vld [vmem:[%s194 + $0x18] sm:$0xff]
        %v237 = vmax.f32 %v229, 0.0
        %v238 = vmax.f32 %v230, 0.0
        %v239 = vmax.f32 %v231, 0.0
        %v240 = vmax.f32 %v232, 0.0
        %v241 = vmul.f32 %v229, %v233
        %v242 = vmul.f32 %v230, %v234
        %v243 = vmul.f32 %v231, %v235
        %v244 = vmul.f32 %v232, %v236
        %v245 = vsub.f32 %v237, %v241
        %v246 = vsub.f32 %v238, %v242
        %v247 = vsub.f32 %v239, %v243
        %v248 = vsub.f32 %v240, %v244
        %v249 = vand.u32 2147483647, %v229
        %v250 = vand.u32 2147483647, %v230
        %v251 = vand.u32 2147483647, %v231
        %v252 = vand.u32 2147483647, %v232
        %v253 = vsub.f32 0.0, %v249
        %v254 = vsub.f32 0.0, %v250
        %v255 = vsub.f32 0.0, %v251
        %v256 = vsub.f32 0.0, %v252
        %v257 = vmul.f32 %v253, 1.442695
        %v258 = vpow.pop %v257
        %v259 = vmul.f32 %v254, 1.442695
        %v260 = vpow.pop %v259
        %v261 = vmul.f32 %v255, 1.442695
        %v262 = vpow.pop %v261
        %v263 = vmul.f32 %v256, 1.442695
        %v264 = vpow.pop %v263
        %v265 = vadd.f32 %v258, 1.0
        %v266 = vlog2.pop %v265
        %v267 = vmul.f32 %v266, 0.6931472
        %v268 = vmul.f32 -0.5, %v258
        %v269 = vadd.f32 %v268, 1.0
        %v270 = vmul.f32 %v269, %v258
        %v271 = vand.u32 2147483647, %v258
        %vm272 = vcmp.lt.f32.partialorder %v271, 0.0004427343
        %v273 = vsel %vm272, %v270, %v267
        %v274 = vadd.f32 %v260, 1.0
        %v275 = vlog2.pop %v274
        %v276 = vmul.f32 %v275, 0.6931472
        %v277 = vmul.f32 -0.5, %v260
        %v278 = vadd.f32 %v277, 1.0
        %v279 = vmul.f32 %v278, %v260
        %v280 = vand.u32 2147483647, %v260
        %vm281 = vcmp.lt.f32.partialorder %v280, 0.0004427343
        %v282 = vsel %vm281, %v279, %v276
        %v283 = vadd.f32 %v262, 1.0
        %v284 = vlog2.pop %v283
        %v285 = vmul.f32 %v284, 0.6931472
        %v286 = vmul.f32 -0.5, %v262
        %v287 = vadd.f32 %v286, 1.0
        %v288 = vmul.f32 %v287, %v262
        %v289 = vand.u32 2147483647, %v262
        %vm290 = vcmp.lt.f32.partialorder %v289, 0.0004427343
        %v291 = vsel %vm290, %v288, %v285
        %v292 = vadd.f32 %v264, 1.0
        %v293 = vlog2.pop %v292
        %v294 = vmul.f32 %v293, 0.6931472
        %v295 = vmul.f32 -0.5, %v264
        %v296 = vadd.f32 %v295, 1.0
        %v297 = vmul.f32 %v296, %v264
        %v298 = vand.u32 2147483647, %v264
        %vm299 = vcmp.lt.f32.partialorder %v298, 0.0004427343
        %v300 = vsel %vm299, %v297, %v294
        %v301 = vadd.f32 %v245, %v273
        %v302 = vadd.f32 %v246, %v282
        %v303 = vadd.f32 %v247, %v291
        %v304 = vadd.f32 %v248, %v300
        %v305 = vld [vmem:[#allocation2] sm:$0xff]
        %v306 = vadd.f32 %v301, %v302
        %v307 = vadd.f32 %v306, %v303
        %v308 = vadd.f32 %v307, %v304
        %v309 = vadd.f32 %v305, %v308
        %310 = vst [vmem:[#allocation2] sm:$0xff] %v309
        // Predicated region
        $region41: #{tpu_custom_call.1} parent=27 // pred_check
          %p311 = pneg %p224
        $region42: #{tpu_custom_call.1} parent=27 // pred_check_branch
          %313 = sbr.rel (%p311) target = $region44
        $region43: #{tpu_custom_call.1} parent=27 // pred_region
          %v314 = vld [vmem:[#allocation2] sm:$0xff]
          %315 = vst [vmem:[%s219] sm:$0xff] %v314
        $region44: #{tpu_custom_call.1} parent=27 // pred_fallthru
          _
        %s316 = sand.u32 %s98, 1
        %s317 = scalar_lea.sflag [#allocation5], %s316
        %s318 = sand.u32 %s98, 1
        %s319 = smul.addr %s318, 8
        %s320 = scalar_lea.vmem [#allocation8], %s319
        // Predicated region
        $region45: #{tpu_custom_call.1} parent=27 // pred_check
          %p321 = pneg %p108
        $region46: #{tpu_custom_call.1} parent=27 // pred_check_branch
          %323 = sbr.rel (%p321) target = $region48
        $region47: #{tpu_custom_call.1} parent=27 // pred_region
          %s325 = ssub.s32 128, 128
          %326 = vsyncadd %s317, %s325
          %s327 = smul.addr %s26, 128
          %s328 = scalar_lea.hbm %s2, %s327
          %s330 = sshll.u32 %s320, 4
          %s331 = int_to_ptr.vmem [resolvable:$true] %s330
          %333 = dma.vmem_to_hbm [thread:$0]  %s331, 128, %s328, %s317
        $region48: #{tpu_custom_call.1} parent=27 // pred_fallthru
          _
      $region28: #{tpu_custom_call.1} parent=5 // pred_fallthru
        _
      %p334 = scmp.le.s32.totalorder 2, %s17
      // Predicated region
      $region49: #{tpu_custom_call.1} parent=5 // pred_check
        %p335 = pneg %p334
      $region50: #{tpu_custom_call.1} parent=5 // pred_check_branch
        %337 = sbr.rel (%p335) target = $region52
      $region51: #{tpu_custom_call.1} parent=5 // pred_region
        %s338 = ssub.s32 %s17, 2
        // Predicated region
        $region53: #{tpu_custom_call.1} parent=51 // pred_check
          %p339 = pneg %p114
        $region54: #{tpu_custom_call.1} parent=51 // pred_check_branch
          %341 = sbr.rel (%p339) target = $region56
        $region55: #{tpu_custom_call.1} parent=51 // pred_region
          %s342 = sand.u32 %s99, 1
          %s343 = scalar_lea.sflag [#allocation5], %s342
          %s344 = sand.u32 %s99, 1
          %s345 = smul.addr %s344, 8
          %s346 = scalar_lea.vmem [#allocation8], %s345
          %347 = dma.done %s343, 128
        $region56: #{tpu_custom_call.1} parent=51 // pred_fallthru
          _
      $region52: #{tpu_custom_call.1} parent=5 // pred_fallthru
        _
    $region6: #{tpu_custom_call.1} parent=1 // loop_footer
      %s21 = sadd.s32 1, %s17
    $region7: #{tpu_custom_call.1} parent=1 // loop_footer_branch
      %16 = sbr.rel target = $region3
    $region8: #{tpu_custom_call.1} parent=1 // loop_exit
      _
    %348 = vsyncpa [#allocation4], 1
    %s349 = scalar_lea.sflag [#allocation4], 1
    %350 = vsyncpa %s349, 1
    %351 = vsyncpa [#allocation7], 1
    %s352 = scalar_lea.sflag [#allocation7], 1
    %353 = vsyncpa %s352, 1
    %354 = vsyncpa [#allocation5], 1
    %s355 = scalar_lea.sflag [#allocation5], 1
    %356 = vsyncpa %s355, 1

</llo_original>
